<compile_context>
chip_gen: v6e
topology: v6e:2x2x1
jax: 0.10.0
libtpu: 0.0.40
codegen_flags: <defaults>
</compile_context>

<pallas_src>
import jax
import jax.numpy as jnp
from jax.experimental import pallas as pl
from jax.experimental.pallas import tpu as pltpu


# 27 taps, ordered to match a C-order flatten of the (3,3,3) kernel:
# t = (kd+1)*9 + (kh+1)*3 + (kw+1)
_TAPS = tuple((kd, kh, kw) for kd in (-1, 0, 1) for kh in (-1, 0, 1) for kw in (-1, 0, 1))


# ---------------------------------------------------------------------------
# pltpu.roll sign-convention probe: the tap shifts use the cheap XLU rotate;
# detect its convention once so the kernel is correct on any jax version.
# ---------------------------------------------------------------------------
def _roll_probe_kernel(x_ref, o_ref):
    o_ref[...] = pltpu.roll(x_ref[...], shift=1, axis=1)


def _detect_roll_sign():
    x = jnp.arange(8 * 128, dtype=jnp.float32).reshape(8, 128)
    y = jax.block_until_ready(
        pl.pallas_call(
            _roll_probe_kernel,
            out_shape=jax.ShapeDtypeStruct((8, 128), jnp.float32),
        )(x))
    v = float(y[0, 1])
    if v == float(x[0, 0]):   # np.roll convention: y[i] = x[i - shift]
        return -1
    if v == float(x[0, 2]):   # opposite convention: y[i] = x[i + shift]
        return 1
    raise RuntimeError("unexpected pltpu.roll semantics")


# ---------------------------------------------------------------------------
# Fused conv_block kernel (one grid step = one batch element)
# ---------------------------------------------------------------------------
def _make_conv_block_kernel(D, H, W, ci, co, eps, roll_sign):
    S = D * H * W
    HW = H * W
    offsets = tuple(kd * HW + kh * W + kw for (kd, kh, kw) in _TAPS)
    f32 = jnp.float32
    HIGH = jax.lax.Precision.HIGHEST

    def kernel(x_ref, w1_ref, w2_ref, ws_ref, gmat_ref, vec_ref, o_ref, taps_ref):
        x = x_ref[0].astype(f32)                               # (ci, S), ci % 8 == 0

        # ---- boundary-validity rows (1, S), generated in-kernel (no mask DMA).
        # Integer-division-free decomposition: only iota/compare/add/mul, which
        # always lower on the VPU.  (At production D/H these comparison sums
        # would be replaced by the S-tile index math.)
        lin = jax.lax.broadcasted_iota(jnp.int32, (1, S), 1)
        d_idx = jnp.zeros_like(lin)
        for k in range(1, D):
            d_idx = d_idx + (lin >= k * HW).astype(jnp.int32)
        rem_hw = lin - d_idx * HW                              # lin % (H*W)
        h_idx = jnp.zeros_like(lin)
        for k in range(1, H):
            h_idx = h_idx + (rem_hw >= k * W).astype(jnp.int32)
        rem_w = rem_hw - h_idx * W                             # lin % W
        ok = (
            (lin >= HW).astype(f32),               # d >= 1
            (lin < (D - 1) * HW).astype(f32),      # d <= D-2
            (rem_hw >= W).astype(f32),             # h >= 1
            (rem_hw < (H - 1) * W).astype(f32),    # h <= H-2
            (rem_w >= 1).astype(f32),              # w >= 1
            (rem_w < (W - 1)).astype(f32),         # w <= W-2
        )

        # 27 combined tap masks (padding=1 emulation for the rolled flat axis),
        # computed once and reused by both convs.
        masks = []
        for (kd, kh, kw) in _TAPS:
            rows = []
            if kd != 0:
                rows.append(ok[0] if kd < 0 else ok[1])
            if kh != 0:
                rows.append(ok[2] if kh < 0 else ok[3])
            if kw != 0:
                rows.append(ok[4] if kw < 0 else ok[5])
            m = None
            for r in rows:
                m = r if m is None else m * r
            masks.append(m)

        def conv3x3x3(inp, c, w_ref, bias_col):
            # im2col: the 27 rolled+masked taps fill the VMEM scratch, then one
            # MXU matmul with contraction depth K = 27*c.
            for t, off in enumerate(offsets):
                xt = inp if off == 0 else pltpu.roll(
                    inp, shift=(roll_sign * off) % S, axis=1)
                if masks[t] is not None:
                    xt = xt * masks[t]
                taps_ref[t * c:(t + 1) * c, :] = xt
            return jnp.dot(w_ref[...], taps_ref[0:27 * c, :],
                           preferred_element_type=f32, precision=HIGH) + bias_col

        def group_mean(v):
            # Per-position group sums via a tiny MXU matmul with the scaled
            # group-membership matrix, then a lane reduce -> (co, 1).
            gb = jnp.dot(gmat_ref[...], v, preferred_element_type=f32, precision=HIGH)
            return jnp.sum(gb, axis=1, keepdims=True)

        def group_norm_relu(h, gamma_col, beta_col):
            mean = group_mean(h)
            cen = h - mean
            var = group_mean(cen * cen)
            scale = jax.lax.rsqrt(var + eps) * gamma_col       # folded affine
            return jnp.maximum(cen * scale + beta_col, 0.0)

        b1, g1w, g1b = vec_ref[:, 0:1], vec_ref[:, 1:2], vec_ref[:, 2:3]
        b2, g2w, g2b = vec_ref[:, 3:4], vec_ref[:, 4:5], vec_ref[:, 5:6]
        bs = vec_ref[:, 6:7]

        h1 = group_norm_relu(conv3x3x3(x, ci, w1_ref, b1), g1w, g1b)
        h2 = group_norm_relu(conv3x3x3(h1, co, w2_ref, b2), g2w, g2b)

        # 1x1x1 residual projection, also on the MXU.
        sc = jnp.dot(ws_ref[...], x, preferred_element_type=f32, precision=HIGH) + bs

        o_ref[0] = (h2 + sc).astype(o_ref.dtype)

    return kernel


def conv_block_pallas(x, conv1_w, conv1_b, gn1_w, gn1_b,
                      conv2_w, conv2_b, gn2_w, gn2_b, sc_w, sc_b,
                      *, num_groups, roll_sign, eps=1e-5):
    """x: (N, Cin, D, H, W) NCDHW; conv weights in PyTorch (O, I, kd, kh, kw) layout."""
    N, Cin, D, H, W = x.shape
    Cout = conv1_w.shape[0]
    S = D * H * W
    cpg = Cout // num_groups
    CI = ((Cin + 7) // 8) * 8        # pad input channels so tap slabs are sublane-aligned
    KMAX = 27 * max(CI, Cout)
    f32 = jnp.float32

    # (N, C, S) view of NCDHW -- a free trailing-dim collapse, no transpose.
    x_flat = x.reshape(N, Cin, S)
    if CI != Cin:
        x_flat = jnp.pad(x_flat, ((0, 0), (0, CI - Cin), (0, 0)))

    # Lane-dense 2D weights matching the im2col row layout (row = t*C + cin).
    w1t = conv1_w.astype(f32).transpose(2, 3, 4, 0, 1).reshape(27, Cout, Cin)
    if CI != Cin:
        w1t = jnp.pad(w1t, ((0, 0), (0, 0), (0, CI - Cin)))
    w1_2d = w1t.transpose(1, 0, 2).reshape(Cout, 27 * CI)

    w2_2d = (conv2_w.astype(f32).transpose(2, 3, 4, 0, 1).reshape(27, Cout, Cout)
             .transpose(1, 0, 2).reshape(Cout, 27 * Cout))

    ws_2d = sc_w.astype(f32).reshape(Cout, Cin)
    if CI != Cin:
        ws_2d = jnp.pad(ws_2d, ((0, 0), (0, CI - Cin)))

    # All per-channel vectors travel as one lane-dense (Cout, 8) array:
    # [conv1_b, gn1_w, gn1_b, conv2_b, gn2_w, gn2_b, sc_b, 0]
    vecs = jnp.stack([conv1_b, gn1_w, gn1_b, conv2_b, gn2_w, gn2_b, sc_b,
                      jnp.zeros_like(sc_b)], axis=1).astype(f32)

    # Scaled group-membership matrix (Cout, Cout): 1/(cpg*S) if same group.
    grp = jnp.arange(Cout) // cpg
    gmat = (grp[:, None] == grp[None, :]).astype(f32) / float(cpg * S)

    kernel = _make_conv_block_kernel(D, H, W, CI, Cout, eps, roll_sign)

    # Explicit scoped-VMEM budget (v5e default is only 16 MiB); capped below
    # v7x's 64 MiB physical VMEM.
    est = 4 * S * (2 * CI + 2 * Cout + KMAX + 32 + 4 * Cout) \
        + 8 * Cout * (27 * CI + 27 * Cout + CI + Cout + 8)
    vmem_limit = int(min(max(2 * est, 32 * 1024 * 1024), 64 * 1024 * 1024))

    out_flat = pl.pallas_call(
        kernel,
        out_shape=jax.ShapeDtypeStruct((N, Cout, S), x.dtype),
        grid_spec=pltpu.PrefetchScalarGridSpec(
            num_scalar_prefetch=0,
            grid=(N,),
            in_specs=[
                pl.BlockSpec((1, CI, S), lambda n: (n, 0, 0)),       # x
                pl.BlockSpec((Cout, 27 * CI), lambda n: (0, 0)),     # conv1 weights
                pl.BlockSpec((Cout, 27 * Cout), lambda n: (0, 0)),   # conv2 weights
                pl.BlockSpec((Cout, CI), lambda n: (0, 0)),          # shortcut weights
                pl.BlockSpec((Cout, Cout), lambda n: (0, 0)),        # group matrix
                pl.BlockSpec((Cout, 8), lambda n: (0, 0)),           # biases / GN affine
            ],
            out_specs=pl.BlockSpec((1, Cout, S), lambda n: (n, 0, 0)),
            scratch_shapes=[pltpu.VMEM((KMAX, S), jnp.float32)],     # im2col tap stack
        ),
        compiler_params=pltpu.CompilerParams(
            dimension_semantics=("parallel",),
            vmem_limit_bytes=vmem_limit),
    )(x_flat, w1_2d, w2_2d, ws_2d, gmat, vecs)

    return out_flat.reshape(N, Cout, D, H, W)


# ---------------------------------------------------------------------------
# Pure-JAX reference mirroring the PyTorch module
# ---------------------------------------------------------------------------
def conv_block_reference(x, conv1_w, conv1_b, gn1_w, gn1_b,
                         conv2_w, conv2_b, gn2_w, gn2_b, sc_w, sc_b,
                         *, num_groups, eps=1e-5):
    dn = ("NCDHW", "OIDHW", "NCDHW")

    def conv3d(inp, w, b, pad):
        out = jax.lax.conv_general_dilated(
            inp, w, window_strides=(1, 1, 1), padding=[(pad, pad)] * 3,
            dimension_numbers=dn, precision=jax.lax.Precision.HIGHEST)
        return out + b.reshape(1, -1, 1, 1, 1)

    def group_norm(inp, gamma, beta):
        n, c, d, h, w = inp.shape
        g = inp.reshape(n, num_groups, c // num_groups, d, h, w)
        mean = g.mean(axis=(2, 3, 4, 5), keepdims=True)
        var = g.var(axis=(2, 3, 4, 5), keepdims=True)
        g = (g - mean) / jnp.sqrt(var + eps)
        out = g.reshape(n, c, d, h, w)
        return out * gamma.reshape(1, -1, 1, 1, 1) + beta.reshape(1, -1, 1, 1, 1)

    h = jax.nn.relu(group_norm(conv3d(x, conv1_w, conv1_b, 1), gn1_w, gn1_b))
    h = jax.nn.relu(group_norm(conv3d(h, conv2_w, conv2_b, 1), gn2_w, gn2_b))
    return h + conv3d(x, sc_w, sc_b, 0)


if __name__ == "__main__":
    key = jax.random.PRNGKey(0)
    N, Cin, Cout = 2, 4, 8
    D = H = W = 8                     # S = 512 -> lane axis a multiple of 128
    num_groups = Cout // 2            # GroupNorm(num_groups=C/2) as in the module
    f32 = jnp.float32

    ks = jax.random.split(key, 11)
    x = jax.random.normal(ks[0], (N, Cin, D, H, W), dtype=f32)

    conv1_w = 0.1 * jax.random.normal(ks[1], (Cout, Cin, 3, 3, 3), f32)
    conv1_b = 0.1 * jax.random.normal(ks[2], (Cout,), f32)
    gn1_w = 1.0 + 0.1 * jax.random.normal(ks[3], (Cout,), f32)
    gn1_b = 0.1 * jax.random.normal(ks[4], (Cout,), f32)
    conv2_w = 0.1 * jax.random.normal(ks[5], (Cout, Cout, 3, 3, 3), f32)
    conv2_b = 0.1 * jax.random.normal(ks[6], (Cout,), f32)
    gn2_w = 1.0 + 0.1 * jax.random.normal(ks[7], (Cout,), f32)
    gn2_b = 0.1 * jax.random.normal(ks[8], (Cout,), f32)
    sc_w = 0.1 * jax.random.normal(ks[9], (Cout, Cin, 1, 1, 1), f32)
    sc_b = 0.1 * jax.random.normal(ks[10], (Cout,), f32)

    roll_sign = _detect_roll_sign()

    out = conv_block_pallas(x, conv1_w, conv1_b, gn1_w, gn1_b,
                            conv2_w, conv2_b, gn2_w, gn2_b, sc_w, sc_b,
                            num_groups=num_groups, roll_sign=roll_sign)
    out = jax.block_until_ready(out)

    ref = conv_block_reference(x, conv1_w, conv1_b, gn1_w, gn1_b,
                               conv2_w, conv2_b, gn2_w, gn2_b, sc_w, sc_b,
                               num_groups=num_groups)

    assert out.shape == (N, Cout, D, H, W) and out.dtype == x.dtype
    err = float(jnp.max(jnp.abs(out - ref)))
    assert err < 1e-3, f"max abs err = {err}"
    print("KERNEL_OK")
</pallas_src>

<mosaic_0001>
module attributes {stable_mosaic.version = 11 : i64} {
  func.func @_roll_probe_kernel(%arg0: memref<8x128xf32, #tpu.memory_space<vmem>>, %arg1: memref<8x128xf32, #tpu.memory_space<vmem>>) attributes {dimension_semantics = [], scalar_prefetch = 0 : i64, scratch_operands = 0 : i64, tpu.core_type = #tpu.core_type<tc>} {
    %c0 = arith.constant 0 : index
    %c0_0 = arith.constant 0 : index
    %0 = vector.load %arg0[%c0, %c0_0] : memref<8x128xf32, #tpu.memory_space<vmem>>, vector<8x128xf32>
    %c1_i32 = arith.constant 1 : i32
    %1 = tpu.dynamic_rotate %0 by %c1_i32 dim 1 : vector<8x128xf32>, i32 -> vector<8x128xf32>
    %c0_1 = arith.constant 0 : index
    %c0_2 = arith.constant 0 : index
    %2 = vector.load %arg1[%c0_1, %c0_2] : memref<8x128xf32, #tpu.memory_space<vmem>>, vector<8x128xf32>
    tpu.vector_store %arg1[%c0_1, %c0_2], %1 {strides = array<i32>} : memref<8x128xf32, #tpu.memory_space<vmem>>, vector<8x128xf32>,
    return
  }
}

</mosaic_0001>

<llo_original>
// kernel: tpu_custom_call.1
$region0: #{tpu_custom_call.1}
  #allocation0 [shape = 'u32[]', space=smem, size = 0x4, offset = 0x4, fixed_abs, tag = 'smem constant byte address 0x4 - core index']
  #allocation1 [shape = 'u32[144,128]{1,0:T(1,128)}', space=vmem, size = 0x12000, scoped, tag = 'internal scratch']
  %s0 = inlined_call_operand.hbm [shape: f32[8,128], index: 0, kind: input, shape index: {}]
  %s1 = inlined_call_operand.hbm [shape: f32[8,128], index: 1, kind: output, shape index: {}]
  %s2 = sld [smem:[#allocation0]]
  $region18: #{tpu_custom_call.1} parent=0
    _
  %s4 = ssub.s32 1, %s2
  %s5 = scalar_select 0, %s4, %s2
  $region1: #{tpu_custom_call.1} parent=0
    #allocation2 [shape = 'u8[4096]{0}', space=vmem, size = 0x1000, scoped, tag = 'input window, operand 0, single buffered']
    #allocation3 [shape = 's32[1]{0}', space=sflag, size = 0x4, scoped, tag = 'scoped memory for tpu_custom_call.1']
    #allocation4 [shape = 's32[1]{0}', space=sflag, size = 0x4, scoped, tag = 'scoped memory for tpu_custom_call.1']
    #allocation5 [shape = 'u8[4096]{0}', space=vmem, size = 0x1000, scoped, tag = 'output window, operand 0, single buffered']
    %6 = vsyncpa [#allocation3], 0
    %7 = vsyncpa [#allocation4], 0
    // Predicated region
    $region2: #{tpu_custom_call.1} parent=1 // pred_check
      _
    $region3: #{tpu_custom_call.1} parent=1 // pred_check_branch
      %9 = sbr.rel (0) target = $region5
    $region4: #{tpu_custom_call.1} parent=1 // pred_region
      %s11 = ssub.s32 128, 128
      %12 = vsyncadd [#allocation3], %s11
      %s14 = sshll.u32 [#allocation2], 4
      %s15 = int_to_ptr.vmem [resolvable:$true] %s14
      %17 = dma.hbm_to_vmem [thread:$0]  %s0, 128, %s15, [#allocation3]
    $region5: #{tpu_custom_call.1} parent=1 // pred_fallthru
      _
    // Predicated region
    $region6: #{tpu_custom_call.1} parent=1 // pred_check
      _
    $region7: #{tpu_custom_call.1} parent=1 // pred_check_branch
      %19 = sbr.rel (0) target = $region9
    $region8: #{tpu_custom_call.1} parent=1 // pred_region
      %20 = dma.done [#allocation3], 128
    $region9: #{tpu_custom_call.1} parent=1 // pred_fallthru
      _
    %v21 = vld [vmem:[#allocation2] sm:$0xff]
    %22 = vrot.lane.b32.xlu0 %v21, 1
    %v23 = vpop.permute.xlu0 %22
    %24 = vst [vmem:[#allocation5] sm:$0xff] %v23
    // Predicated region
    $region10: #{tpu_custom_call.1} parent=1 // pred_check
      _
    $region11: #{tpu_custom_call.1} parent=1 // pred_check_branch
      %26 = sbr.rel (0) target = $region13
    $region12: #{tpu_custom_call.1} parent=1 // pred_region
      %s28 = ssub.s32 128, 128
      %29 = vsyncadd [#allocation4], %s28
      %s31 = sshll.u32 [#allocation5], 4
      %s32 = int_to_ptr.vmem [resolvable:$true] %s31
      %34 = dma.vmem_to_hbm [thread:$0]  %s32, 128, %s1, [#allocation4]
    $region13: #{tpu_custom_call.1} parent=1 // pred_fallthru
      _
    // Predicated region
    $region14: #{tpu_custom_call.1} parent=1 // pred_check
      _
    $region15: #{tpu_custom_call.1} parent=1 // pred_check_branch
      %36 = sbr.rel (0) target = $region17
    $region16: #{tpu_custom_call.1} parent=1 // pred_region
      %37 = dma.done [#allocation4], 128
    $region17: #{tpu_custom_call.1} parent=1 // pred_fallthru
      _
    %38 = vsyncpa [#allocation3], 1
    %39 = vsyncpa [#allocation4], 1

</llo_original>
